<compile_context>
chip_gen: v7x
topology: tpu7x:2x2x1
jax: 0.10.0
libtpu: 0.0.40
codegen_flags: <defaults>
</compile_context>

<pallas_src>
import jax
import jax.numpy as jnp
from jax import lax
from jax.experimental import pallas as pl
from jax.experimental.pallas import tpu as pltpu


def _round_up(x, m):
    return ((x + m - 1) // m) * m


def _vmem_capacity_bytes():
    """Physical VMEM per core (128 MiB v5e/v6e, 64 MiB v7x); conservative fallback."""
    try:
        cap = getattr(pltpu.get_tpu_info(), "vmem_capacity_bytes", None)
        if cap:
            return int(cap)
    except Exception:
        pass
    return 64 * 1024 * 1024


def _pick_batch_tile(B, batch_tile):
    """Batch-tile size: multiple of 8 (or == B when tiny), with >= 2 reasonably
    balanced tiles whenever B allows it so the 'parallel' batch axis keeps both v7x
    TensorCores busy.  TB only affects the tiny epilogue matmul, so shrinking is free."""
    if B <= 8:
        return B
    tb = min(batch_tile, _round_up(B, 8))
    if pl.cdiv(B, tb) <= 2:                 # 1 tile, or 2 possibly very lopsided tiles
        tb = _round_up(pl.cdiv(B, 2), 8)    # split ~evenly into 2 tiles
    return tb


def sbert_pool_project_kernel(emb_ref, len_ref, inv_ref, proj_ref, out_ref, acc_ref):
    """Masked mean-pool over the sequence, then project with text_projection.

    Grid: (batch_tiles [parallel], seq_tiles [arbitrary, reduction]).

    emb_ref  : (TB, TS, H)  per-token hidden states (f32 or bf16)
    len_ref  : (TB, 1, 1)   int32 per-row token counts (prefix-mask lengths)
    inv_ref  : (TB, 1)      f32   1 / clamp(token_count, 1e-9)
    proj_ref : (H, D)       text_projection parameter (VMEM-resident across the grid)
    out_ref  : (TB, D)      projected sentence features (written at last seq step)
    acc_ref  : (TB, H) f32  running masked sum (VMEM scratch)
    """
    s = pl.program_id(1)
    tb, ts, _ = emb_ref.shape

    @pl.when(s == 0)
    def _init():
        acc_ref[...] = jnp.zeros_like(acc_ref)

    # In-kernel prefix mask from per-row lengths: sequence position vs. length.
    # jnp.where (select) keeps garbage from partial boundary blocks (possibly NaN/Inf)
    # out of the arithmetic; the select stays in the input dtype and f32 appears only
    # at the accumulate.
    pos = lax.broadcasted_iota(jnp.int32, (tb, ts, 1), 1) + s * ts   # (TB, TS, 1)
    valid = pos < len_ref[...]                                       # (TB, TS, 1)
    masked = jnp.where(valid, emb_ref[...], 0)                       # (TB, TS, H)
    acc_ref[...] += jnp.sum(masked, axis=1, dtype=jnp.float32)       # (TB, H)

    @pl.when(s == pl.num_programs(1) - 1)
    def _finalize():
        # sentence-transformers mean pooling, then features = pooled @ text_projection.
        pooled = acc_ref[...] * inv_ref[...]                         # (TB, H) f32
        out_ref[...] = jnp.dot(
            pooled, proj_ref[...], preferred_element_type=jnp.float32
        ).astype(out_ref.dtype)


def sbert_forward(token_embeddings, attention_mask, text_projection,
                  *, batch_tile=128, emb_block_bytes=None, vmem_limit_bytes=None):
    """Pallas-backed SBERT.forward on pre-encoded token hidden states.

    token_embeddings : (B, S, H) f32 or bf16   per-token hidden states
    attention_mask   : (B, S)                  1 = real token, 0 = pad (prefix mask)
    text_projection  : (H, D)
    returns          : (B, D) f32
    """
    B, S, H = token_embeddings.shape
    H2, D = text_projection.shape
    assert H == H2

    # Per-example token counts.  Tokenizer attention masks are prefix masks (1s then
    # 0s), so lengths capture them exactly and the (B, S, 1) float mask stream is gone.
    # TODO(synk): arbitrary (non-prefix) masks would need an int8 mask operand instead.
    counts = jnp.sum(attention_mask.astype(jnp.float32), axis=-1)            # (B,)
    lengths = counts.astype(jnp.int32).reshape(B, 1, 1)                      # mask build
    inv_counts = (1.0 / jnp.maximum(counts, 1e-9)).astype(jnp.float32).reshape(B, 1)

    # ---- tile sizing ----------------------------------------------------------
    TB = _pick_batch_tile(B, batch_tile)
    # TODO(synk): for B <= 8 with very long S, a 2-way "parallel" split of the sequence
    # reduction (partial accumulators + cheap combine) would keep both v7x TCs busy.

    # VMEM budget per chip generation: scoped limit ~= 3/4 of physical VMEM
    # (96 MiB on v5e/v6e, 48 MiB on v7x); embedding block <= 1/6 of that limit so two
    # pipeline buffers plus masking/upcast intermediates and the small operands
    # (lengths, inv counts, projection weight, accumulator) fit with headroom.
    if vmem_limit_bytes is None:
        vmem_limit_bytes = min((_vmem_capacity_bytes() * 3) // 4, 112 * 1024 * 1024)
    if emb_block_bytes is None:
        emb_block_bytes = min(vmem_limit_bytes // 6, 16 * 1024 * 1024)

    esize = jnp.dtype(token_embeddings.dtype).itemsize
    ts_cap = max(8, (emb_block_bytes // (TB * H * esize)) // 8 * 8)
    TS = S if S <= ts_cap else ts_cap        # whole-S block, or a multiple of 8

    # No host-side padding of the (B, S, H) stream: partial boundary blocks are
    # handled by Pallas and masked in-kernel.
    grid = (pl.cdiv(B, TB), pl.cdiv(S, TS))  # (parallel batch, arbitrary/reduction seq)

    out = pl.pallas_call(
        sbert_pool_project_kernel,
        out_shape=jax.ShapeDtypeStruct((B, D), jnp.float32),
        grid_spec=pltpu.PrefetchScalarGridSpec(
            num_scalar_prefetch=0,
            grid=grid,
            in_specs=[
                pl.BlockSpec((TB, TS, H), lambda b, s: (b, s, 0)),
                pl.BlockSpec((TB, 1, 1), lambda b, s: (b, 0, 0)),  # lengths (per batch tile)
                pl.BlockSpec((TB, 1), lambda b, s: (b, 0)),        # 1/count (per batch tile)
                pl.BlockSpec((H, D), lambda b, s: (0, 0)),         # VMEM-resident weight
            ],
            out_specs=pl.BlockSpec((TB, D), lambda b, s: (b, 0)),
            scratch_shapes=[
                pltpu.VMEM((TB, H), jnp.float32),                  # masked-sum accumulator
            ],
        ),
        compiler_params=pltpu.CompilerParams(
            dimension_semantics=("parallel", "arbitrary"),
            vmem_limit_bytes=int(vmem_limit_bytes),
        ),
    )(token_embeddings, lengths, inv_counts, text_projection)

    return out


def reference_forward(token_embeddings, attention_mask, text_projection):
    emb = token_embeddings.astype(jnp.float32)
    mask = attention_mask.astype(jnp.float32)[..., None]
    summed = jnp.sum(emb * mask, axis=1)
    counts = jnp.maximum(jnp.sum(mask, axis=1), 1e-9)
    pooled = summed / counts
    return jnp.dot(pooled, text_projection.astype(jnp.float32),
                   precision=lax.Precision.HIGHEST)


if __name__ == "__main__":
    # Shapes consistent with the module: width=512 (fixed in SBERT.__init__),
    # batch=2 sentences, seq=8 tokens, output_dim=128 (text_projection: 512 -> 128).
    B, S, H, D = 2, 8, 512, 128

    key = jax.random.PRNGKey(0)
    k_emb, k_proj, k_emb2, k_len2 = jax.random.split(key, 4)

    # Deterministic synthetic per-token hidden states (output of the frozen encoder).
    token_embeddings = jax.random.normal(k_emb, (B, S, H), dtype=jnp.float32)

    # Attention mask with variable sentence lengths (lengths 8 and 5).
    lengths = jnp.array([8, 5], dtype=jnp.int32)
    attention_mask = (jnp.arange(S)[None, :] < lengths[:, None]).astype(jnp.float32)

    # Deterministic text_projection parameter (nn.Parameter of shape (width, output_dim)).
    text_projection = jax.random.normal(k_proj, (H, D), dtype=jnp.float32) * 0.02

    # --- check 1: small f32 case (single tile, TB == B) ---------------------------
    out = sbert_forward(token_embeddings, attention_mask, text_projection)
    out = jax.block_until_ready(out)
    ref = reference_forward(token_embeddings, attention_mask, text_projection)
    assert out.shape == (B, D)
    assert jnp.allclose(out, ref, atol=2e-3, rtol=2e-3), "mismatch vs reference (f32)"

    # --- check 2: bf16 embeddings, multi-tile grid with partial boundary blocks ----
    B2, S2 = 130, 28
    emb2 = jax.random.normal(k_emb2, (B2, S2, H), dtype=jnp.float32)
    len2 = jax.random.randint(k_len2, (B2,), 1, S2 + 1)
    mask2 = (jnp.arange(S2)[None, :] < len2[:, None]).astype(jnp.float32)
    emb2_bf16 = emb2.astype(jnp.bfloat16)

    out2 = sbert_forward(emb2_bf16, mask2, text_projection,
                         batch_tile=128, emb_block_bytes=1 << 20)
    out2 = jax.block_until_ready(out2)
    ref2 = reference_forward(emb2_bf16.astype(jnp.float32), mask2, text_projection)
    assert out2.shape == (B2, D)
    assert jnp.allclose(out2, ref2, atol=1e-2, rtol=1e-2), "mismatch vs reference (bf16, tiled)"

    print("KERNEL_OK")
</pallas_src>

<mosaic_0001>
module attributes {stable_mosaic.version = 11 : i64} {
  func.func @sbert_pool_project_kernel(%arg0: i32, %arg1: i32, %arg2: memref<2x8x512xf32, #tpu.memory_space<vmem>>, %arg3: memref<2x1x1xi32, #tpu.memory_space<vmem>>, %arg4: memref<2x1xf32, #tpu.memory_space<vmem>>, %arg5: memref<512x128xf32, #tpu.memory_space<vmem>>, %arg6: memref<2x128xf32, #tpu.memory_space<vmem>>, %arg7: memref<2x512xf32, #tpu.memory_space<vmem>>) attributes {dimension_semantics = [#tpu.dimension_semantics<parallel>, #tpu.dimension_semantics<arbitrary>], iteration_bounds = array<i64: 1, 1>, scalar_prefetch = 0 : i64, scratch_operands = 1 : i64, tpu.core_type = #tpu.core_type<tc>, window_params = [{transform_indices = @transform_0, window_bounds = array<i64: 2, 8, 512>}, {transform_indices = @transform_1, window_bounds = array<i64: 2, 1, 1>}, {transform_indices = @transform_2, window_bounds = array<i64: 2, 1>}, {pipeline_mode = #tpu.pipeline_mode<synchronous>, transform_indices = @transform_3, window_bounds = array<i64: 512, 128>}, {transform_indices = @transform_4, window_bounds = array<i64: 2, 128>}]} {
    %c0_i32 = arith.constant 0 : i32
    %0 = arith.cmpi eq, %arg1, %c0_i32 : i32
    %1 = arith.extui %0 : i1 to i32
    %c0_i32_0 = arith.constant 0 : i32
    %2 = arith.cmpi ne, %1, %c0_i32_0 : i32
    scf.if %2 {
      %cst_13 = arith.constant 0.000000e+00 : f32
      %23 = vector.broadcast %cst_13 : f32 to vector<2x512xf32>
      %c0_14 = arith.constant 0 : index
      %c0_15 = arith.constant 0 : index
      %24 = vector.load %arg7[%c0_14, %c0_15] : memref<2x512xf32, #tpu.memory_space<vmem>>, vector<2x512xf32>
      tpu.vector_store %arg7[%c0_14, %c0_15], %23 {strides = array<i32>} : memref<2x512xf32, #tpu.memory_space<vmem>>, vector<2x512xf32>,
    } else {
    }
    %3 = tpu.iota {dimensions = array<i32: 1>} : vector<2x8x1xi32>
    %c8_i32 = arith.constant 8 : i32
    %4 = arith.muli %arg1, %c8_i32 : i32
    %5 = vector.broadcast %4 : i32 to vector<2x8x1xi32>
    %6 = arith.addi %3, %5 : vector<2x8x1xi32>
    %c0 = arith.constant 0 : index
    %c0_1 = arith.constant 0 : index
    %c0_2 = arith.constant 0 : index
    %7 = vector.load %arg3[%c0, %c0_1, %c0_2] : memref<2x1x1xi32, #tpu.memory_space<vmem>>, vector<2x1x1xi32>
    %8 = vector.broadcast %7 : vector<2x1x1xi32> to vector<2x8x1xi32>
    %9 = arith.cmpi slt, %6, %8 : vector<2x8x1xi32>
    %c0_3 = arith.constant 0 : index
    %c0_4 = arith.constant 0 : index
    %c0_5 = arith.constant 0 : index
    %10 = vector.load %arg2[%c0_3, %c0_4, %c0_5] : memref<2x8x512xf32, #tpu.memory_space<vmem>>, vector<2x8x512xf32>
    %c0_i32_6 = arith.constant 0 : i32
    %11 = arith.sitofp %c0_i32_6 : i32 to f32
    %12 = vector.shape_cast %9 : vector<2x8x1xi1> to vector<2x8x1xi1>
    %13 = vector.broadcast %12 : vector<2x8x1xi1> to vector<2x8x512xi1>
    %14 = vector.broadcast %11 : f32 to vector<2x8x512xf32>
    %15 = arith.select %13, %10, %14 : vector<2x8x512xi1>, vector<2x8x512xf32>
    %c0_7 = arith.constant 0 : index
    %c0_8 = arith.constant 0 : index
    %16 = vector.load %arg7[%c0_7, %c0_8] : memref<2x512xf32, #tpu.memory_space<vmem>>, vector<2x512xf32>
    %cst = arith.constant dense<0.000000e+00> : vector<2x512xf32>
    %17 = vector.multi_reduction <add>, %15, %cst [1] : vector<2x8x512xf32> to vector<2x512xf32>
    %18 = arith.addf %16, %17 : vector<2x512xf32>
    %c0_9 = arith.constant 0 : index
    %c0_10 = arith.constant 0 : index
    %19 = vector.load %arg7[%c0_9, %c0_10] : memref<2x512xf32, #tpu.memory_space<vmem>>, vector<2x512xf32>
    tpu.vector_store %arg7[%c0_9, %c0_10], %18 {strides = array<i32>} : memref<2x512xf32, #tpu.memory_space<vmem>>, vector<2x512xf32>,
    %c0_i32_11 = arith.constant 0 : i32
    %20 = arith.cmpi eq, %arg1, %c0_i32_11 : i32
    %21 = arith.extui %20 : i1 to i32
    %c0_i32_12 = arith.constant 0 : i32
    %22 = arith.cmpi ne, %21, %c0_i32_12 : i32
    scf.if %22 {
      %c0_13 = arith.constant 0 : index
      %c0_14 = arith.constant 0 : index
      %23 = vector.load %arg7[%c0_13, %c0_14] : memref<2x512xf32, #tpu.memory_space<vmem>>, vector<2x512xf32>
      %c0_15 = arith.constant 0 : index
      %c0_16 = arith.constant 0 : index
      %24 = vector.load %arg4[%c0_15, %c0_16] : memref<2x1xf32, #tpu.memory_space<vmem>>, vector<2x1xf32>
      %25 = vector.broadcast %24 : vector<2x1xf32> to vector<2x512xf32>
      %26 = arith.mulf %23, %25 : vector<2x512xf32>
      %c0_17 = arith.constant 0 : index
      %c0_18 = arith.constant 0 : index
      %27 = vector.load %arg5[%c0_17, %c0_18] : memref<512x128xf32, #tpu.memory_space<vmem>>, vector<512x128xf32>
      %cst_19 = arith.constant dense<0.000000e+00> : vector<2x128xf32>
      %28 = tpu.matmul %26, %27, %cst_19 {dimension_numbers = #tpu.dot_dimension_numbers<[1], [0], [0], [1], [0, 0, 1, 1], [], []>} : vector<2x512xf32>, vector<512x128xf32>, vector<2x128xf32> -> vector<2x128xf32>
      %c0_20 = arith.constant 0 : index
      %c0_21 = arith.constant 0 : index
      %29 = vector.load %arg6[%c0_20, %c0_21] : memref<2x128xf32, #tpu.memory_space<vmem>>, vector<2x128xf32>
      tpu.vector_store %arg6[%c0_20, %c0_21], %28 {strides = array<i32>} : memref<2x128xf32, #tpu.memory_space<vmem>>, vector<2x128xf32>,
    } else {
    }
    return
  }
  func.func @transform_0(%arg0: i32, %arg1: i32) -> (i32, i32, i32) {
    %c0_i32 = arith.constant 0 : i32
    %c0_i32_0 = arith.constant 0 : i32
    return %arg0, %arg1, %c0_i32 : i32, i32, i32
  }
  func.func @transform_1(%arg0: i32, %arg1: i32) -> (i32, i32, i32) {
    %c0_i32 = arith.constant 0 : i32
    %c0_i32_0 = arith.constant 0 : i32
    %c0_i32_1 = arith.constant 0 : i32
    return %arg0, %c0_i32, %c0_i32_0 : i32, i32, i32
  }
  func.func @transform_2(%arg0: i32, %arg1: i32) -> (i32, i32) {
    %c0_i32 = arith.constant 0 : i32
    %c0_i32_0 = arith.constant 0 : i32
    return %arg0, %c0_i32 : i32, i32
  }
  func.func @transform_3(%arg0: i32, %arg1: i32) -> (i32, i32) {
    %c0_i32 = arith.constant 0 : i32
    %c0_i32_0 = arith.constant 0 : i32
    %c0_i32_1 = arith.constant 0 : i32
    return %c0_i32, %c0_i32_0 : i32, i32
  }
  func.func @transform_4(%arg0: i32, %arg1: i32) -> (i32, i32) {
    %c0_i32 = arith.constant 0 : i32
    %c0_i32_0 = arith.constant 0 : i32
    return %arg0, %c0_i32 : i32, i32
  }
}

</mosaic_0001>

<llo_original>
// kernel: tpu_custom_call.1
$region0: #{tpu_custom_call.1}
  #allocation0 [shape = 'u32[]', space=smem, size = 0x4, offset = 0x4, fixed_abs, tag = 'smem constant byte address 0x4 - core index']
  #allocation1 [shape = 'u32[144,128]{1,0:T(1,128)}', space=vmem, size = 0x12000, scoped, tag = 'internal scratch']
  #allocation2 [shape = 'f32[2,512]{1,0:T(2,128)}', space=vmem, size = 0x1000, scoped, tag = 'scratch operand']
  %s0 = inlined_call_operand.hbm [shape: f32[2,8,512], index: 0, kind: input, shape index: {}]
  %s1 = inlined_call_operand.vmem [shape: s32[2,1,1], index: 1, kind: input, shape index: {}]
  %s2 = inlined_call_operand.vmem [shape: f32[2,1], index: 2, kind: input, shape index: {}]
  %s3 = inlined_call_operand.hbm [shape: f32[512,128], index: 3, kind: input, shape index: {}]
  %s4 = inlined_call_operand.hbm [shape: f32[2,128], index: 4, kind: output, shape index: {}]
  %s5 = sld [smem:[#allocation0]]
  $region42: #{tpu_custom_call.1} parent=0
    _
  %s7 = ssub.s32 1, %s5
  %s8 = scalar_select 0, %s7, %s5
  $region1: #{tpu_custom_call.1} parent=0
    #allocation3 [shape = 'u8[32768]{0}', space=vmem, size = 0x8000, scoped, tag = 'input window, operand 0, single buffered']
    #allocation4 [shape = 's32[1]{0}', space=sflag, size = 0x4, scoped, tag = 'scoped memory for tpu_custom_call.1']
    #allocation5 [shape = 's32[1]{0}', space=sflag, size = 0x4, scoped, tag = 'scoped memory for tpu_custom_call.1']
    #allocation6 [shape = 'u8[262144]{0}', space=vmem, size = 0x40000, scoped, tag = 'input window, operand 3, single buffered']
    #allocation7 [shape = 's32[1]{0}', space=sflag, size = 0x4, scoped, tag = 'scoped memory for tpu_custom_call.1']
    #allocation8 [shape = 'u8[1024]{0}', space=vmem, size = 0x400, scoped, tag = 'output window, operand 0, single buffered']
    %9 = vsyncpa [#allocation4], 0
    %10 = vsyncpa [#allocation7], 0
    %11 = vsyncpa [#allocation5], 0
    // Predicated region
    $region2: #{tpu_custom_call.1} parent=1 // pred_check
      _
    $region3: #{tpu_custom_call.1} parent=1 // pred_check_branch
      %13 = sbr.rel (0) target = $region5
    $region4: #{tpu_custom_call.1} parent=1 // pred_region
      %s15 = ssub.s32 1024, 1024
      %16 = vsyncadd [#allocation4], %s15
      %s17 = sshll.u32 [#allocation3], 4
      %s18 = int_to_ptr.vmem [resolvable:$true] %s17
      %23 = dma.hbm_to_vmem [thread:$0]  %s0, 1024, %s18, [#allocation4], 512, 512, 32
    $region5: #{tpu_custom_call.1} parent=1 // pred_fallthru
      _
    // Predicated region
    $region6: #{tpu_custom_call.1} parent=1 // pred_check
      _
    $region7: #{tpu_custom_call.1} parent=1 // pred_check_branch
      %25 = sbr.rel (0) target = $region9
    $region8: #{tpu_custom_call.1} parent=1 // pred_region
      _
    $region9: #{tpu_custom_call.1} parent=1 // pred_fallthru
      _
    // Predicated region
    $region10: #{tpu_custom_call.1} parent=1 // pred_check
      _
    $region11: #{tpu_custom_call.1} parent=1 // pred_check_branch
      %27 = sbr.rel (0) target = $region13
    $region12: #{tpu_custom_call.1} parent=1 // pred_region
      _
    $region13: #{tpu_custom_call.1} parent=1 // pred_fallthru
      _
    // Predicated region
    $region14: #{tpu_custom_call.1} parent=1 // pred_check
      _
    $region15: #{tpu_custom_call.1} parent=1 // pred_check_branch
      %29 = sbr.rel (0) target = $region17
    $region16: #{tpu_custom_call.1} parent=1 // pred_region
      %s31 = ssub.s32 8192, 8192
      %32 = vsyncadd [#allocation7], %s31
      %s33 = sshll.u32 [#allocation6], 4
      %s34 = int_to_ptr.vmem [resolvable:$true] %s33
      %39 = dma.hbm_to_vmem [thread:$0]  %s3, 8192, %s34, [#allocation7], 128, 128, 8
    $region17: #{tpu_custom_call.1} parent=1 // pred_fallthru
      _
    // Predicated region
    $region18: #{tpu_custom_call.1} parent=1 // pred_check
      _
    $region19: #{tpu_custom_call.1} parent=1 // pred_check_branch
      %41 = sbr.rel (0) target = $region21
    $region20: #{tpu_custom_call.1} parent=1 // pred_region
      %42 = dma.done [#allocation4], 1024
    $region21: #{tpu_custom_call.1} parent=1 // pred_fallthru
      _
    // Predicated region
    $region22: #{tpu_custom_call.1} parent=1 // pred_check
      _
    $region23: #{tpu_custom_call.1} parent=1 // pred_check_branch
      %44 = sbr.rel (0) target = $region25
    $region24: #{tpu_custom_call.1} parent=1 // pred_region
      %45 = dma.done [#allocation7], 8192
    $region25: #{tpu_custom_call.1} parent=1 // pred_fallthru
      _
    %p46 = scmp.eq.s32.totalorder 0, 0
    // Predicated region
    $region26: #{tpu_custom_call.1} parent=1 // pred_check
      %p47 = pneg %p46
    $region27: #{tpu_custom_call.1} parent=1 // pred_check_branch
      %49 = sbr.rel (%p47) target = $region29
    $region28: #{tpu_custom_call.1} parent=1 // pred_region
      %50 = vst [vmem:[#allocation2] sm:$0xff] 0.0
    $region29: #{tpu_custom_call.1} parent=1 // pred_fallthru
      _
    %v51 = vlaneseq
    %v52 = vshrl.u32 %v51, 7
    %s53 = smul.u32 0, 8
    %v54 = vstv %s53
    %v55 = vadd.s32 %v52, %v54
    %v56 = vld [vmem:[%s1] sm:$0x1]
    %v57 = vld [vmem:[%s1 + $0x1] sm:$0x1]
    %v58 = vlaneseq
    %v59 = vshrl.u32 %v58, 7
    %v60 = vsub.s32 0, %v59
    %v61 = vrot.slane %v56, %v60
    %v62 = vlaneseq
    %v63 = vshrl.u32 %v62, 7
    %v64 = vsub.s32 0, %v63
    %v65 = vrot.slane %v57, %v64
    %vm66 = vcmp.lt.s32.totalorder %v55, %v61
    %vm67 = vcmp.lt.s32.totalorder %v55, %v65
    %v68 = vld [vmem:[#allocation3] sm:$0xff]
    %v69 = vld [vmem:[#allocation3 + $0x8] sm:$0xff]
    %v70 = vld [vmem:[#allocation3 + $0x10] sm:$0xff]
    %v71 = vld [vmem:[#allocation3 + $0x18] sm:$0xff]
    %v72 = vld [vmem:[#allocation3 + $0x20] sm:$0xff]
    %v73 = vld [vmem:[#allocation3 + $0x28] sm:$0xff]
    %v74 = vld [vmem:[#allocation3 + $0x30] sm:$0xff]
    %v75 = vld [vmem:[#allocation3 + $0x38] sm:$0xff]
    %v76 = vsel %vm66, 1, 0
    %v77 = vsel %vm67, 1, 0
    %78 = vset.pattern.permute.xlu0 0
    %79 = vperm.xlu0 %78, %v76
    %v80 = vpop.permute.xlu0 %79
    %81 = vset.pattern.permute.xlu0 0
    %82 = vperm.xlu0 %81, %v77
    %v83 = vpop.permute.xlu0 %82
    %vm84 = vcmp.eq.s32.totalorder %v80, 1
    %vm85 = vcmp.eq.s32.totalorder %v83, 1
    %v86 = vsel %vm84, %v68, 0.0
    %v87 = vsel %vm84, %v69, 0.0
    %v88 = vsel %vm84, %v70, 0.0
    %v89 = vsel %vm84, %v71, 0.0
    %v90 = vsel %vm85, %v72, 0.0
    %v91 = vsel %vm85, %v73, 0.0
    %v92 = vsel %vm85, %v74, 0.0
    %v93 = vsel %vm85, %v75, 0.0
    %v94 = vld [vmem:[#allocation2] sm:$0xff]
    %v95 = vrot.slane %v86, 4
    %v96 = vadd.f32 %v86, %v95
    %v97 = vrot.slane %v96, 2
    %v98 = vadd.f32 %v96, %v97
    %v99 = vrot.slane %v98, 1
    %v100 = vadd.f32 %v98, %v99
    %v101 = vrot.slane %v87, 4
    %v102 = vadd.f32 %v87, %v101
    %v103 = vrot.slane %v102, 2
    %v104 = vadd.f32 %v102, %v103
    %v105 = vrot.slane %v104, 1
    %v106 = vadd.f32 %v104, %v105
    %v107 = vrot.slane %v88, 4
    %v108 = vadd.f32 %v88, %v107
    %v109 = vrot.slane %v108, 2
    %v110 = vadd.f32 %v108, %v109
    %v111 = vrot.slane %v110, 1
    %v112 = vadd.f32 %v110, %v111
    %v113 = vrot.slane %v89, 4
    %v114 = vadd.f32 %v89, %v113
    %v115 = vrot.slane %v114, 2
    %v116 = vadd.f32 %v114, %v115
    %v117 = vrot.slane %v116, 1
    %v118 = vadd.f32 %v116, %v117
    %v119 = vrot.slane %v90, 4
    %v120 = vadd.f32 %v90, %v119
    %v121 = vrot.slane %v120, 2
    %v122 = vadd.f32 %v120, %v121
    %v123 = vrot.slane %v122, 1
    %v124 = vadd.f32 %v122, %v123
    %v125 = vrot.slane %v91, 4
    %v126 = vadd.f32 %v91, %v125
    %v127 = vrot.slane %v126, 2
    %v128 = vadd.f32 %v126, %v127
    %v129 = vrot.slane %v128, 1
    %v130 = vadd.f32 %v128, %v129
    %v131 = vrot.slane %v92, 4
    %v132 = vadd.f32 %v92, %v131
    %v133 = vrot.slane %v132, 2
    %v134 = vadd.f32 %v132, %v133
    %v135 = vrot.slane %v134, 1
    %v136 = vadd.f32 %v134, %v135
    %v137 = vrot.slane %v93, 4
    %v138 = vadd.f32 %v93, %v137
    %v139 = vrot.slane %v138, 2
    %v140 = vadd.f32 %v138, %v139
    %v141 = vrot.slane %v140, 1
    %v142 = vadd.f32 %v140, %v141
    %v151 = vcombine.low %v100, %v106
    %v152 = vcombine.low %v112, %v118
    %v154 = vunpack.c.l.s4 1983009808
    %v155 = vunpack.c.0.s8 %v154
    %v156 = vlaneseq
    %v157 = vshrl.u32 %v156, 7
    %v158 = vsub.s32 %v155, %v157
    %v159 = vrot.slane %v151, %v158
    %v161 = vunpack.c.l.s4 1983009808
    %v162 = vunpack.c.0.s8 %v161
    %v163 = vlaneseq
    %v164 = vshrl.u32 %v163, 7
    %v165 = vsub.s32 %v162, %v164
    %v166 = vrot.slane %v152, %v165
    %v167 = vcombine.low %v159, %v166
    %v168 = vcombine.low %v124, %v130
    %v169 = vcombine.low %v136, %v142
    %v171 = vunpack.c.l.s4 1983009808
    %v172 = vunpack.c.0.s8 %v171
    %v173 = vlaneseq
    %v174 = vshrl.u32 %v173, 7
    %v175 = vsub.s32 %v172, %v174
    %v176 = vrot.slane %v168, %v175
    %v178 = vunpack.c.l.s4 1983009808
    %v179 = vunpack.c.0.s8 %v178
    %v180 = vlaneseq
    %v181 = vshrl.u32 %v180, 7
    %v182 = vsub.s32 %v179, %v181
    %v183 = vrot.slane %v169, %v182
    %v184 = vcombine.low %v176, %v183
    %vm185 = vcmask 1044484
    %v186 = vsel %vm185, %v167, %v167
    %vm187 = vcmask 1046534
    %v188 = vsel %vm187, %v167, %v186
    %v189 = vrot.slane %v184, 7
    %vm190 = vcmask 1041409
    %v191 = vsel %vm190, %v189, %v188
    %vm192 = vcmask 1043459
    %v193 = vsel %vm192, %v189, %v191
    %vm194 = vcmask 1045509
    %v195 = vsel %vm194, %v189, %v193
    %vm196 = vcmask 1047559
    %v197 = vsel %vm196, %v189, %v195
    %v199 = vadd.f32 %v94, %v197
    %200 = vst [vmem:[#allocation2] sm:$0xff] %v199
    // Predicated region
    $region30: #{tpu_custom_call.1} parent=1 // pred_check
      %p201 = pneg %p46
    $region31: #{tpu_custom_call.1} parent=1 // pred_check_branch
      %203 = sbr.rel (%p201) target = $region33
    $region32: #{tpu_custom_call.1} parent=1 // pred_region
      %v204 = vld [vmem:[#allocation2] sm:$0xff]
      %v205 = vld [vmem:[%s2] sm:$0x3]
      %207 = vset.pattern.permute.xlu0 0
      %208 = vperm.xlu0 %207, %v205
      %v209 = vpop.permute.xlu0 %208
      %v211 = vunpack.c.l.s4 269488144
      %v212 = vunpack.c.0.s8 %v211
      %v213 = vlaneseq
      %v214 = vshrl.u32 %v213, 7
      %v215 = vsub.s32 %v212, %v214
      %v216 = vrot.slane %v209, %v215
      %v218 = vmul.f32 %v204, %v216
      %v219 = vld [vmem:[#allocation6] sm:$0xff]
      %v220 = vld [vmem:[#allocation6 + $0x8] sm:$0xff]
      %v221 = vld [vmem:[#allocation6 + $0x10] sm:$0xff]
      %v222 = vld [vmem:[#allocation6 + $0x18] sm:$0xff]
      %v223 = vld [vmem:[#allocation6 + $0x20] sm:$0xff]
      %v224 = vld [vmem:[#allocation6 + $0x28] sm:$0xff]
      %v225 = vld [vmem:[#allocation6 + $0x30] sm:$0xff]
      %v226 = vld [vmem:[#allocation6 + $0x38] sm:$0xff]
      %v227 = vld [vmem:[#allocation6 + $0x40] sm:$0xff]
      %v228 = vld [vmem:[#allocation6 + $0x48] sm:$0xff]
      %v229 = vld [vmem:[#allocation6 + $0x50] sm:$0xff]
      %v230 = vld [vmem:[#allocation6 + $0x58] sm:$0xff]
      %v231 = vld [vmem:[#allocation6 + $0x60] sm:$0xff]
      %v232 = vld [vmem:[#allocation6 + $0x68] sm:$0xff]
      %v233 = vld [vmem:[#allocation6 + $0x70] sm:$0xff]
      %v234 = vld [vmem:[#allocation6 + $0x78] sm:$0xff]
      %v235 = vld [vmem:[#allocation6 + $0x80] sm:$0xff]
      %v236 = vld [vmem:[#allocation6 + $0x88] sm:$0xff]
      %v237 = vld [vmem:[#allocation6 + $0x90] sm:$0xff]
      %v238 = vld [vmem:[#allocation6 + $0x98] sm:$0xff]
      %v239 = vld [vmem:[#allocation6 + $0xa0] sm:$0xff]
      %v240 = vld [vmem:[#allocation6 + $0xa8] sm:$0xff]
      %v241 = vld [vmem:[#allocation6 + $0xb0] sm:$0xff]
      %v242 = vld [vmem:[#allocation6 + $0xb8] sm:$0xff]
      %v243 = vld [vmem:[#allocation6 + $0xc0] sm:$0xff]
      %v244 = vld [vmem:[#allocation6 + $0xc8] sm:$0xff]
      %v245 = vld [vmem:[#allocation6 + $0xd0] sm:$0xff]
      %v246 = vld [vmem:[#allocation6 + $0xd8] sm:$0xff]
      %v247 = vld [vmem:[#allocation6 + $0xe0] sm:$0xff]
      %v248 = vld [vmem:[#allocation6 + $0xe8] sm:$0xff]
      %v249 = vld [vmem:[#allocation6 + $0xf0] sm:$0xff]
      %v250 = vld [vmem:[#allocation6 + $0xf8] sm:$0xff]
      %v251 = vld [vmem:[#allocation6 + $0x100] sm:$0xff]
      %v252 = vld [vmem:[#allocation6 + $0x108] sm:$0xff]
      %v253 = vld [vmem:[#allocation6 + $0x110] sm:$0xff]
      %v254 = vld [vmem:[#allocation6 + $0x118] sm:$0xff]
      %v255 = vld [vmem:[#allocation6 + $0x120] sm:$0xff]
      %v256 = vld [vmem:[#allocation6 + $0x128] sm:$0xff]
      %v257 = vld [vmem:[#allocation6 + $0x130] sm:$0xff]
      %v258 = vld [vmem:[#allocation6 + $0x138] sm:$0xff]
      %v259 = vld [vmem:[#allocation6 + $0x140] sm:$0xff]
      %v260 = vld [vmem:[#allocation6 + $0x148] sm:$0xff]
      %v261 = vld [vmem:[#allocation6 + $0x150] sm:$0xff]
      %v262 = vld [vmem:[#allocation6 + $0x158] sm:$0xff]
      %v263 = vld [vmem:[#allocation6 + $0x160] sm:$0xff]
      %v264 = vld [vmem:[#allocation6 + $0x168] sm:$0xff]
      %v265 = vld [vmem:[#allocation6 + $0x170] sm:$0xff]
      %v266 = vld [vmem:[#allocation6 + $0x178] sm:$0xff]
      %v267 = vld [vmem:[#allocation6 + $0x180] sm:$0xff]
      %v268 = vld [vmem:[#allocation6 + $0x188] sm:$0xff]
      %v269 = vld [vmem:[#allocation6 + $0x190] sm:$0xff]
      %v270 = vld [vmem:[#allocation6 + $0x198] sm:$0xff]
      %v271 = vld [vmem:[#allocation6 + $0x1a0] sm:$0xff]
      %v272 = vld [vmem:[#allocation6 + $0x1a8] sm:$0xff]
      %v273 = vld [vmem:[#allocation6 + $0x1b0] sm:$0xff]
      %v274 = vld [vmem:[#allocation6 + $0x1b8] sm:$0xff]
      %v275 = vld [vmem:[#allocation6 + $0x1c0] sm:$0xff]
      %v276 = vld [vmem:[#allocation6 + $0x1c8] sm:$0xff]
      %v277 = vld [vmem:[#allocation6 + $0x1d0] sm:$0xff]
      %v278 = vld [vmem:[#allocation6 + $0x1d8] sm:$0xff]
      %v279 = vld [vmem:[#allocation6 + $0x1e0] sm:$0xff]
      %v280 = vld [vmem:[#allocation6 + $0x1e8] sm:$0xff]
      %v281 = vld [vmem:[#allocation6 + $0x1f0] sm:$0xff]
      %v282 = vld [vmem:[#allocation6 + $0x1f8] sm:$0xff]
      %v284 = vcombine.high %v218, %v218
      %v286 = vunpack.c.l.s4 1983009808
      %v287 = vunpack.c.0.s8 %v286
      %v288 = vlaneseq
      %v289 = vshrl.u32 %v288, 7
      %v290 = vsub.s32 %v287, %v289
      %v291 = vrot.slane %v218, %v290
      %v293 = vunpack.c.l.s4 1983009808
      %v294 = vunpack.c.0.s8 %v293
      %v295 = vlaneseq
      %v296 = vshrl.u32 %v295, 7
      %v297 = vsub.s32 %v294, %v296
      %v298 = vrot.slane %v284, %v297
      %v299 = vcombine.high %v291, %v291
      %v300 = vcombine.high %v298, %v298
      %305 = vmatprep.subr.mxu0 0.0
      %306 = vmatpush1.msra.mxu0 %v219
      %307 = vmatprep.subr.mxu0 0.0
      %308 = vmatpush1.msra.mxu0 %v220
      %309 = vmatprep.subr.mxu0 0.0
      %310 = vmatpush1.msra.mxu0 %v221
      %311 = vmatprep.subr.mxu0 0.0
      %312 = vmatpush1.msra.mxu0 %v222
      %313 = vmatprep.subr.mxu0 0.0
      %314 = vmatpush1.msra.mxu0 %v223
      %315 = vmatprep.subr.mxu0 0.0
      %316 = vmatpush1.msra.mxu0 %v224
      %317 = vmatprep.subr.mxu0 0.0
      %318 = vmatpush1.msra.mxu0 %v225
      %319 = vmatprep.subr.mxu0 0.0
      %320 = vmatpush1.msra.mxu0 %v226
      %321 = vmatprep.subr.mxu0 0.0
      %322 = vmatpush1.msra.mxu0 %v227
      %323 = vmatprep.subr.mxu0 0.0
      %324 = vmatpush1.msra.mxu0 %v228
      %325 = vmatprep.subr.mxu0 0.0
      %326 = vmatpush1.msra.mxu0 %v229
      %327 = vmatprep.subr.mxu0 0.0
      %328 = vmatpush1.msra.mxu0 %v230
      %329 = vmatprep.subr.mxu0 0.0
      %330 = vmatpush1.msra.mxu0 %v231
      %331 = vmatprep.subr.mxu0 0.0
      %332 = vmatpush1.msra.mxu0 %v232
      %333 = vmatprep.subr.mxu0 0.0
      %334 = vmatpush1.msra.mxu0 %v233
      %335 = vmatprep.subr.mxu0 0.0
      %336 = vmatpush1.msra.mxu0 %v234
      %337 = vmatprep.subr.mxu0 0.0
      %338 = vmatpush1.msra.mxu0 %v235
      %339 = vmatprep.subr.mxu0 0.0
      %340 = vmatpush1.msra.mxu0 %v236
      %341 = vmatprep.subr.mxu0 0.0
      %342 = vmatpush1.msra.mxu0 %v237
      %343 = vmatprep.subr.mxu0 0.0
      %344 = vmatpush1.msra.mxu0 %v238
      %345 = vmatprep.subr.mxu0 0.0
      %346 = vmatpush1.msra.mxu0 %v239
      %347 = vmatprep.subr.mxu0 0.0
      %348 = vmatpush1.msra.mxu0 %v240
      %349 = vmatprep.subr.mxu0 0.0
      %350 = vmatpush1.msra.mxu0 %v241
      %351 = vmatprep.subr.mxu0 0.0
      %352 = vmatpush1.msra.mxu0 %v242
      %353 = vmatprep.subr.mxu0 0.0
      %354 = vmatpush1.msra.mxu0 %v243
      %355 = vmatprep.subr.mxu0 0.0
      %356 = vmatpush1.msra.mxu0 %v244
      %357 = vmatprep.subr.mxu0 0.0
      %358 = vmatpush1.msra.mxu0 %v245
      %359 = vmatprep.subr.mxu0 0.0
      %360 = vmatpush1.msra.mxu0 %v246
      %361 = vmatprep.subr.mxu0 0.0
      %362 = vmatpush1.msra.mxu0 %v247
      %363 = vmatprep.subr.mxu0 0.0
      %364 = vmatpush1.msra.mxu0 %v248
      %365 = vmatprep.subr.mxu0 0.0
      %366 = vmatpush1.msra.mxu0 %v249
      %367 = vmatprep.subr.mxu0 0.0
      %368 = vmatpush1.msra.mxu0 %v250
      %369 = vmatprep.mubr.f32.mxu0 %v299
      %370 = vmatmul.mubr.f32.gmra.mrb[0].mxu0 %v291
      %v371 = vpop.f32.mrb[0].mxu0
      %v372 = vadd.f32 0.0, %v371
      %v373 = vpop.f32.mrb[0].mxu0
      %374 = vdwg.mxu0
      %375 = vmatprep.subr.mxu0 0.0
      %376 = vmatpush1.msra.mxu0 %v251
      %377 = vmatprep.subr.mxu0 0.0
      %378 = vmatpush1.msra.mxu0 %v252
      %379 = vmatprep.subr.mxu0 0.0
      %380 = vmatpush1.msra.mxu0 %v253
      %381 = vmatprep.subr.mxu0 0.0
      %382 = vmatpush1.msra.mxu0 %v254
      %383 = vmatprep.subr.mxu0 0.0
      %384 = vmatpush1.msra.mxu0 %v255
      %385 = vmatprep.subr.mxu0 0.0
      %386 = vmatpush1.msra.mxu0 %v256
      %387 = vmatprep.subr.mxu0 0.0
      %388 = vmatpush1.msra.mxu0 %v257
      %389 = vmatprep.subr.mxu0 0.0
      %390 = vmatpush1.msra.mxu0 %v258
      %391 = vmatprep.subr.mxu0 0.0
      %392 = vmatpush1.msra.mxu0 %v259
      %393 = vmatprep.subr.mxu0 0.0
      %394 = vmatpush1.msra.mxu0 %v260
      %395 = vmatprep.subr.mxu0 0.0
      %396 = vmatpush1.msra.mxu0 %v261
      %397 = vmatprep.subr.mxu0 0.0
      %398 = vmatpush1.msra.mxu0 %v262
      %399 = vmatprep.subr.mxu0 0.0
      %400 = vmatpush1.msra.mxu0 %v263
      %401 = vmatprep.subr.mxu0 0.0
      %402 = vmatpush1.msra.mxu0 %v264
      %403 = vmatprep.subr.mxu0 0.0
      %404 = vmatpush1.msra.mxu0 %v265
      %405 = vmatprep.subr.mxu0 0.0
      %406 = vmatpush1.msra.mxu0 %v266
      %407 = vmatprep.subr.mxu0 0.0
      %408 = vmatpush1.msra.mxu0 %v267
      %409 = vmatprep.subr.mxu0 0.0
      %410 = vmatpush1.msra.mxu0 %v268
      %411 = vmatprep.subr.mxu0 0.0
      %412 = vmatpush1.msra.mxu0 %v269
      %413 = vmatprep.subr.mxu0 0.0
      %414 = vmatpush1.msra.mxu0 %v270
      %415 = vmatprep.subr.mxu0 0.0
      %416 = vmatpush1.msra.mxu0 %v271
      %417 = vmatprep.subr.mxu0 0.0
      %418 = vmatpush1.msra.mxu0 %v272
      %419 = vmatprep.subr.mxu0 0.0
      %420 = vmatpush1.msra.mxu0 %v273
      %421 = vmatprep.subr.mxu0 0.0
      %422 = vmatpush1.msra.mxu0 %v274
      %423 = vmatprep.subr.mxu0 0.0
      %424 = vmatpush1.msra.mxu0 %v275
      %425 = vmatprep.subr.mxu0 0.0
      %426 = vmatpush1.msra.mxu0 %v276
      %427 = vmatprep.subr.mxu0 0.0
      %428 = vmatpush1.msra.mxu0 %v277
      %429 = vmatprep.subr.mxu0 0.0
      %430 = vmatpush1.msra.mxu0 %v278
      %431 = vmatprep.subr.mxu0 0.0
      %432 = vmatpush1.msra.mxu0 %v279
      %433 = vmatprep.subr.mxu0 0.0
      %434 = vmatpush1.msra.mxu0 %v280
      %435 = vmatprep.subr.mxu0 0.0
      %436 = vmatpush1.msra.mxu0 %v281
      %437 = vmatprep.subr.mxu0 0.0
      %438 = vmatpush1.msra.mxu0 %v282
      %439 = vmatprep.mubr.f32.mxu0 %v300
      %440 = vmatmul.mubr.f32.gmra.mrb[0].mxu0 %v298
      %v441 = vpop.f32.mrb[0].mxu0
      %v442 = vadd.f32 %v372, %v441
      %v443 = vpop.f32.mrb[0].mxu0
      %444 = vdwg.mxu0
      %445 = vst [vmem:[#allocation8] sm:$0x3] %v442
    $region33: #{tpu_custom_call.1} parent=1 // pred_fallthru
      _
    // Predicated region
    $region34: #{tpu_custom_call.1} parent=1 // pred_check
      _
    $region35: #{tpu_custom_call.1} parent=1 // pred_check_branch
      %447 = sbr.rel (0) target = $region37
    $region36: #{tpu_custom_call.1} parent=1 // pred_region
      %s449 = ssub.s32 32, 32
      %450 = vsyncadd [#allocation5], %s449
      %s452 = sshll.u32 [#allocation8], 4
      %s453 = int_to_ptr.vmem [resolvable:$true] %s452
      %455 = dma.vmem_to_hbm [thread:$0]  %s453, 32, %s4, [#allocation5]
    $region37: #{tpu_custom_call.1} parent=1 // pred_fallthru
      _
    // Predicated region
    $region38: #{tpu_custom_call.1} parent=1 // pred_check
      _
    $region39: #{tpu_custom_call.1} parent=1 // pred_check_branch
      %457 = sbr.rel (0) target = $region41
    $region40: #{tpu_custom_call.1} parent=1 // pred_region
      %458 = dma.done [#allocation5], 32
    $region41: #{tpu_custom_call.1} parent=1 // pred_fallthru
      _
    %459 = vsyncpa [#allocation4], 1
    %460 = vsyncpa [#allocation7], 1
    %461 = vsyncpa [#allocation5], 1

</llo_original>
